<compile_context>
chip_gen: v6e
topology: v6e:2x2x1
jax: 0.10.0
libtpu: 0.0.40
codegen_flags: <defaults>
</compile_context>

<pallas_src>
import jax
import jax.numpy as jnp
from jax.experimental import pallas as pl
from jax.experimental.pallas import tpu as pltpu
import numpy as np


def _round_up(n, m):
    return ((n + m - 1) // m) * m


def policy_kernel(x_ref, w1_ref, b1_ref, w2_ref, b2_ref, w3_ref, b3_ref, o_ref):
    # Shapes inside the kernel (batch_tile = bt):
    #   x_ref : (bt, num_inputs)        f32  -- streamed tile, straight from HBM
    #   w*    : (out, in)               f32  -- PyTorch nn.Linear weight layout
    #   b*    : (out, 1)                f32  -- column vector, broadcasts over lanes
    #   o_ref : (num_outputs, bt)       f32  -- natively lane-dense output
    x = x_ref[...]

    # Layer 1: W1 @ x^T -> (hidden, bt).  Contracting both operands on their
    # last (feature) axis expresses the x transpose as matmul dimension
    # numbers; batch lands on the lane axis for the rest of the kernel.
    h1 = jnp.tanh(
        jax.lax.dot_general(
            w1_ref[...], x,
            dimension_numbers=(((1,), (1,)), ((), ())),
            preferred_element_type=jnp.float32,
        )
        + b1_ref[...]
    )
    # Layers 2/3 are already (feature, batch): plain matmuls with N = bt, so
    # the MXU lanes are full and tanh/sigmoid run on full vregs.
    h2 = jnp.tanh(
        jnp.dot(w2_ref[...], h1, preferred_element_type=jnp.float32) + b2_ref[...]
    )
    logits = (
        jnp.dot(w3_ref[...], h2, preferred_element_type=jnp.float32) + b3_ref[...]
    )
    o_ref[...] = jax.nn.sigmoid(logits)


def policy_forward(x, params, *, batch_tile=2048):
    """x: (B, num_inputs) f32.  params: W1/W2/W3 as (out, in) f32 (PyTorch
    nn.Linear layout), b1/b2/b3 as (out, 1) f32.  Returns (B, num_outputs) f32
    sigmoid probabilities."""
    B, num_inputs = x.shape
    hidden = params["W1"].shape[0]
    num_outputs = params["W3"].shape[0]
    assert params["W1"].shape == (hidden, num_inputs)
    assert params["W2"].shape == (hidden, hidden)
    assert params["W3"].shape == (num_outputs, hidden)
    if x.dtype != jnp.float32:
        x = x.astype(jnp.float32)

    # Batch tile: multiple of 128 (lane width); clamp for small batches.
    # v7x note: pick batch_tile so the grid has an even, >=2 step count
    # (two TensorCores); sweep 2048-8192 for production batch sizes.
    bt = max(128, min(batch_tile, _round_up(B, 128)))
    bt = (bt // 128) * 128
    grid_steps = pl.cdiv(B, bt)  # partial last block handled by masked stores

    # Real per-step VMEM footprint: double-buffered x and output tiles,
    # resident (double-buffered) weights/biases, and the f32 x^T/h1/h2 values.
    f32b = 4
    w_elems = (hidden * num_inputs + hidden * hidden + hidden * num_outputs
               + 2 * hidden + num_outputs)
    vmem_est = (2 * bt * num_inputs * f32b            # x double buffer
                + 2 * num_outputs * bt * f32b         # output double buffer
                + 2 * w_elems * f32b                  # weights / biases
                + (num_inputs + 2 * hidden) * bt * f32b)  # x^T, h1, h2 temporaries
    assert vmem_est < 48 * 1024 * 1024, (
        f"per-step VMEM estimate {vmem_est / 2**20:.1f} MiB too large; "
        "reduce batch_tile")

    cp_kwargs = dict(dimension_semantics=("parallel",))
    if vmem_est > 16 * 1024 * 1024:
        cp_kwargs["vmem_limit_bytes"] = int(
            min(max(2 * vmem_est, 32 * 1024 * 1024), 60 * 1024 * 1024))

    def resident(shape):
        # Constant block index every grid step -> fetched once, stays in VMEM.
        return pl.BlockSpec(shape, lambda i: (0, 0))

    out_t = pl.pallas_call(
        policy_kernel,
        out_shape=jax.ShapeDtypeStruct((num_outputs, B), jnp.float32),
        grid_spec=pltpu.PrefetchScalarGridSpec(
            num_scalar_prefetch=0,
            grid=(grid_steps,),
            in_specs=[
                pl.BlockSpec((bt, num_inputs), lambda i: (i, 0)),  # x tile (f32)
                resident((hidden, num_inputs)),    # W1
                resident((hidden, 1)),             # b1
                resident((hidden, hidden)),        # W2
                resident((hidden, 1)),             # b2
                resident((num_outputs, hidden)),   # W3
                resident((num_outputs, 1)),        # b3
            ],
            out_specs=pl.BlockSpec((num_outputs, bt), lambda i: (0, i)),
        ),
        compiler_params=pltpu.CompilerParams(**cp_kwargs),
    )(
        x,
        params["W1"], params["b1"],
        params["W2"], params["b2"],
        params["W3"], params["b3"],
    )
    # (num_outputs, B) -> (B, num_outputs): tiny XLA transpose outside the kernel.
    return out_t.T


def init_params(key, num_inputs, num_outputs, hidden_dim):
    """nn.Linear default init U[-1/sqrt(fan_in), 1/sqrt(fan_in)], weights kept
    in PyTorch (out_features, in_features) layout, biases as (out, 1)."""
    k1, k2, k3, k4, k5, k6 = jax.random.split(key, 6)

    def uniform(k, shape, fan_in):
        bound = 1.0 / np.sqrt(fan_in)
        return jax.random.uniform(k, shape, jnp.float32, -bound, bound)

    return {
        "W1": uniform(k1, (hidden_dim, num_inputs), num_inputs),
        "b1": uniform(k2, (hidden_dim, 1), num_inputs),
        "W2": uniform(k3, (hidden_dim, hidden_dim), hidden_dim),
        "b2": uniform(k4, (hidden_dim, 1), hidden_dim),
        "W3": uniform(k5, (num_outputs, hidden_dim), hidden_dim),
        "b3": uniform(k6, (num_outputs, 1), hidden_dim),
    }


def policy_ref(x, p):
    """Pure-JAX f32 reference (highest matmul precision) mirroring PyTorch."""
    hp = jax.lax.Precision.HIGHEST
    h1 = jnp.tanh(jnp.dot(x, p["W1"].T, precision=hp) + p["b1"][:, 0])
    h2 = jnp.tanh(jnp.dot(h1, p["W2"].T, precision=hp) + p["b2"][:, 0])
    logits = jnp.dot(h2, p["W3"].T, precision=hp) + p["b3"][:, 0]
    return jax.nn.sigmoid(logits)


if __name__ == "__main__":
    key = jax.random.PRNGKey(0)
    k_x, k_p = jax.random.split(key)

    # Small demo shapes; batch_tile=128 gives an even 2-step grid (exercises
    # the parallel/megacore path) while staying tiny.
    batch, num_inputs, num_outputs, hidden_dim = 256, 32, 4, 64
    x = jax.random.normal(k_x, (batch, num_inputs), jnp.float32)
    params = init_params(k_p, num_inputs, num_outputs, hidden_dim)

    out = policy_forward(x, params, batch_tile=128)
    out = jax.block_until_ready(out)

    expected = policy_ref(x, params)
    # Loose-ish tolerance only to absorb MXU-vs-XLA f32 accumulation /
    # precision-mode differences; a real bug would be O(0.1) on probabilities.
    np.testing.assert_allclose(np.asarray(out), np.asarray(expected),
                               rtol=2e-3, atol=2e-3)
    assert out.shape == (batch, num_outputs)
    assert np.all(np.asarray(out) > 0.0) and np.all(np.asarray(out) < 1.0)
    # TODO(synk): StochasticPolicy.entropy() (Bernoulli entropy mean) and the
    # external `normalizer` are not part of forward(); left to plain JAX.
    print("KERNEL_OK")
</pallas_src>

<mosaic_0001>
module attributes {stable_mosaic.version = 11 : i64} {
  func.func @policy_kernel(%arg0: i32, %arg1: memref<128x32xf32, #tpu.memory_space<vmem>>, %arg2: memref<64x32xf32, #tpu.memory_space<vmem>>, %arg3: memref<64x1xf32, #tpu.memory_space<vmem>>, %arg4: memref<64x64xf32, #tpu.memory_space<vmem>>, %arg5: memref<64x1xf32, #tpu.memory_space<vmem>>, %arg6: memref<4x64xf32, #tpu.memory_space<vmem>>, %arg7: memref<4x1xf32, #tpu.memory_space<vmem>>, %arg8: memref<4x128xf32, #tpu.memory_space<vmem>>) attributes {dimension_semantics = [#tpu.dimension_semantics<parallel>], iteration_bounds = array<i64: 2>, scalar_prefetch = 0 : i64, scratch_operands = 0 : i64, tpu.core_type = #tpu.core_type<tc>, window_params = [{transform_indices = @transform_0, window_bounds = array<i64: 128, 32>}, {pipeline_mode = #tpu.pipeline_mode<synchronous>, transform_indices = @transform_1, window_bounds = array<i64: 64, 32>}, {pipeline_mode = #tpu.pipeline_mode<synchronous>, transform_indices = @transform_2, window_bounds = array<i64: 64, 1>}, {pipeline_mode = #tpu.pipeline_mode<synchronous>, transform_indices = @transform_3, window_bounds = array<i64: 64, 64>}, {pipeline_mode = #tpu.pipeline_mode<synchronous>, transform_indices = @transform_4, window_bounds = array<i64: 64, 1>}, {pipeline_mode = #tpu.pipeline_mode<synchronous>, transform_indices = @transform_5, window_bounds = array<i64: 4, 64>}, {pipeline_mode = #tpu.pipeline_mode<synchronous>, transform_indices = @transform_6, window_bounds = array<i64: 4, 1>}, {transform_indices = @transform_7, window_bounds = array<i64: 4, 128>}]} {
    %c0 = arith.constant 0 : index
    %c0_0 = arith.constant 0 : index
    %0 = vector.load %arg1[%c0, %c0_0] : memref<128x32xf32, #tpu.memory_space<vmem>>, vector<128x32xf32>
    %c0_1 = arith.constant 0 : index
    %c0_2 = arith.constant 0 : index
    %1 = vector.load %arg2[%c0_1, %c0_2] : memref<64x32xf32, #tpu.memory_space<vmem>>, vector<64x32xf32>
    %cst = arith.constant dense<0.000000e+00> : vector<64x128xf32>
    %2 = tpu.matmul %1, %0, %cst {dimension_numbers = #tpu.dot_dimension_numbers<[1], [1], [0], [0], [0, 0, 1, 0], [], []>} : vector<64x32xf32>, vector<128x32xf32>, vector<64x128xf32> -> vector<64x128xf32>
    %c0_3 = arith.constant 0 : index
    %c0_4 = arith.constant 0 : index
    %3 = vector.load %arg3[%c0_3, %c0_4] : memref<64x1xf32, #tpu.memory_space<vmem>>, vector<64x1xf32>
    %4 = vector.broadcast %3 : vector<64x1xf32> to vector<64x128xf32>
    %5 = arith.addf %2, %4 : vector<64x128xf32>
    %6 = math.tanh %5 : vector<64x128xf32>
    %c0_5 = arith.constant 0 : index
    %c0_6 = arith.constant 0 : index
    %7 = vector.load %arg4[%c0_5, %c0_6] : memref<64x64xf32, #tpu.memory_space<vmem>>, vector<64x64xf32>
    %cst_7 = arith.constant dense<0.000000e+00> : vector<64x128xf32>
    %8 = tpu.matmul %7, %6, %cst_7 {dimension_numbers = #tpu.dot_dimension_numbers<[1], [0], [0], [1], [0, 0, 1, 1], [], []>} : vector<64x64xf32>, vector<64x128xf32>, vector<64x128xf32> -> vector<64x128xf32>
    %c0_8 = arith.constant 0 : index
    %c0_9 = arith.constant 0 : index
    %9 = vector.load %arg5[%c0_8, %c0_9] : memref<64x1xf32, #tpu.memory_space<vmem>>, vector<64x1xf32>
    %10 = vector.broadcast %9 : vector<64x1xf32> to vector<64x128xf32>
    %11 = arith.addf %8, %10 : vector<64x128xf32>
    %12 = math.tanh %11 : vector<64x128xf32>
    %c0_10 = arith.constant 0 : index
    %c0_11 = arith.constant 0 : index
    %13 = vector.load %arg6[%c0_10, %c0_11] : memref<4x64xf32, #tpu.memory_space<vmem>>, vector<4x64xf32>
    %cst_12 = arith.constant dense<0.000000e+00> : vector<4x128xf32>
    %14 = tpu.matmul %13, %12, %cst_12 {dimension_numbers = #tpu.dot_dimension_numbers<[1], [0], [0], [1], [0, 0, 1, 1], [], []>} : vector<4x64xf32>, vector<64x128xf32>, vector<4x128xf32> -> vector<4x128xf32>
    %c0_13 = arith.constant 0 : index
    %c0_14 = arith.constant 0 : index
    %15 = vector.load %arg7[%c0_13, %c0_14] : memref<4x1xf32, #tpu.memory_space<vmem>>, vector<4x1xf32>
    %16 = vector.broadcast %15 : vector<4x1xf32> to vector<4x128xf32>
    %17 = arith.addf %14, %16 : vector<4x128xf32>
    %18 = arith.negf %17 : vector<4x128xf32>
    %19 = math.exp %18 : vector<4x128xf32>
    %cst_15 = arith.constant 1.000000e+00 : f32
    %20 = vector.broadcast %cst_15 : f32 to vector<4x128xf32>
    %21 = arith.addf %20, %19 : vector<4x128xf32>
    %22 = arith.divf %20, %21 : vector<4x128xf32>
    %c0_16 = arith.constant 0 : index
    %c0_17 = arith.constant 0 : index
    %23 = vector.load %arg8[%c0_16, %c0_17] : memref<4x128xf32, #tpu.memory_space<vmem>>, vector<4x128xf32>
    tpu.vector_store %arg8[%c0_16, %c0_17], %22 {strides = array<i32>} : memref<4x128xf32, #tpu.memory_space<vmem>>, vector<4x128xf32>,
    return
  }
  func.func @transform_0(%arg0: i32) -> (i32, i32) {
    %c0_i32 = arith.constant 0 : i32
    %c0_i32_0 = arith.constant 0 : i32
    return %arg0, %c0_i32 : i32, i32
  }
  func.func @transform_1(%arg0: i32) -> (i32, i32) {
    %c0_i32 = arith.constant 0 : i32
    %c0_i32_0 = arith.constant 0 : i32
    %c0_i32_1 = arith.constant 0 : i32
    return %c0_i32, %c0_i32_0 : i32, i32
  }
  func.func @transform_2(%arg0: i32) -> (i32, i32) {
    %c0_i32 = arith.constant 0 : i32
    %c0_i32_0 = arith.constant 0 : i32
    %c0_i32_1 = arith.constant 0 : i32
    return %c0_i32, %c0_i32_0 : i32, i32
  }
  func.func @transform_3(%arg0: i32) -> (i32, i32) {
    %c0_i32 = arith.constant 0 : i32
    %c0_i32_0 = arith.constant 0 : i32
    %c0_i32_1 = arith.constant 0 : i32
    return %c0_i32, %c0_i32_0 : i32, i32
  }
  func.func @transform_4(%arg0: i32) -> (i32, i32) {
    %c0_i32 = arith.constant 0 : i32
    %c0_i32_0 = arith.constant 0 : i32
    %c0_i32_1 = arith.constant 0 : i32
    return %c0_i32, %c0_i32_0 : i32, i32
  }
  func.func @transform_5(%arg0: i32) -> (i32, i32) {
    %c0_i32 = arith.constant 0 : i32
    %c0_i32_0 = arith.constant 0 : i32
    %c0_i32_1 = arith.constant 0 : i32
    return %c0_i32, %c0_i32_0 : i32, i32
  }
  func.func @transform_6(%arg0: i32) -> (i32, i32) {
    %c0_i32 = arith.constant 0 : i32
    %c0_i32_0 = arith.constant 0 : i32
    %c0_i32_1 = arith.constant 0 : i32
    return %c0_i32, %c0_i32_0 : i32, i32
  }
  func.func @transform_7(%arg0: i32) -> (i32, i32) {
    %c0_i32 = arith.constant 0 : i32
    %c0_i32_0 = arith.constant 0 : i32
    return %c0_i32, %arg0 : i32, i32
  }
}

</mosaic_0001>

<llo_original>
// kernel: tpu_custom_call.1
$region0: #{tpu_custom_call.1}
  #allocation0 [shape = 'u32[]', space=smem, size = 0x4, offset = 0x4, fixed_abs, tag = 'smem constant byte address 0x4 - core index']
  #allocation1 [shape = 'u32[144,128]{1,0:T(1,128)}', space=vmem, size = 0x12000, scoped, tag = 'internal scratch']
  %s0 = inlined_call_operand.vmem [shape: f32[256,32], index: 0, kind: input, shape index: {}]
  %s1 = inlined_call_operand.vmem [shape: f32[64,32], index: 1, kind: input, shape index: {}]
  %s2 = inlined_call_operand.vmem [shape: f32[64,1], index: 2, kind: input, shape index: {}]
  %s3 = inlined_call_operand.vmem [shape: f32[64,64], index: 3, kind: input, shape index: {}]
  %s4 = inlined_call_operand.vmem [shape: f32[64,1], index: 4, kind: input, shape index: {}]
  %s5 = inlined_call_operand.vmem [shape: f32[4,64], index: 5, kind: input, shape index: {}]
  %s6 = inlined_call_operand.vmem [shape: f32[4,1], index: 6, kind: input, shape index: {}]
  %s7 = inlined_call_operand.hbm [shape: f32[4,256], index: 7, kind: output, shape index: {}]
  %s8 = sld [smem:[#allocation0]]
  $region61: #{tpu_custom_call.1} parent=0
    _
  %s10 = ssub.s32 1, %s8
  %s11 = scalar_select 0, %s10, %s8
  $region1: #{tpu_custom_call.1} parent=0
    #allocation2 [shape = 'u8[4096]{0}', space=vmem, size = 0x1000, scoped, tag = 'output window, operand 0']
    #allocation3 [shape = 's32[2]{0}', space=sflag, size = 0x8, scoped, tag = 'scoped memory for tpu_custom_call.1']
    %12 = vsyncpa [#allocation3], 0
    %s13 = scalar_lea.sflag [#allocation3], 1
    %14 = vsyncpa %s13, 0
    loop: start=0, step=1, limit=4
    $region2: #{tpu_custom_call.1} parent=1 // loop_pre_header
      _
    $region3: #{tpu_custom_call.1} parent=1 // loop_header
      %s16 = sphi 0, %s20
      %p17 = scmp.ge.s32.totalorder %s16, 4
      %s26 = sphi 0, %s28
      %s29 = sphi 0, %s26
      %s30 = sphi 0, %s29
      %s46 = sphi 0, %s30
      %s50 = sphi 0, %s50
      %s52 = sphi 0, %s50
      %s53 = sphi 0, %s52
      %s67 = sphi 0, %s53
      %s71 = sphi 0, %s71
      %s73 = sphi 0, %s71
      %s74 = sphi 0, %s73
      %s88 = sphi 0, %s74
      %s92 = sphi 0, %s92
      %s94 = sphi 0, %s92
      %s95 = sphi 0, %s94
      %s109 = sphi 0, %s95
      %s113 = sphi 0, %s113
      %s115 = sphi 0, %s113
      %s116 = sphi 0, %s115
      %s130 = sphi 0, %s116
      %s134 = sphi 0, %s134
      %s136 = sphi 0, %s134
      %s137 = sphi 0, %s136
      %s151 = sphi 0, %s137
      %s155 = sphi 0, %s155
      %s157 = sphi 0, %s155
      %s158 = sphi 0, %s157
      %s172 = sphi 0, %s158
      %s178 = sphi 0, %s180
      %s181 = sphi 0, %s178
      %s182 = sphi 0, %s181
      %s198 = sphi 0, %s182
    $region4: #{tpu_custom_call.1} parent=1 // loop_header_branch
      %19 = sbr.rel (%p17) target = $region8
    $region5: #{tpu_custom_call.1} parent=1 // loop_body
      %s21 = ssub.s32 %s16, 1
      %s22 = ssub.s32 %s16, 2
      %s23 = sadd.s32 %s16, 1
      %s24 = ssub.s32 %s16, %s23
      %p25 = scmp.eq.s32.totalorder %s24, 0
      %s27 = sadd.s32 %s26, 1
      %s28 = scalar_select %p25, %s26, %s27
      %p31 = pneg %p25
      %p32 = scmp.eq.s32.totalorder %s16, 1
      %p33 = por %p31, %p32
      %p34 = scmp.ne.s32.totalorder %s26, %s29
      %p35 = scmp.eq.s32.totalorder %s16, 0
      %p36 = por %p34, %p35
      %p37 = scmp.ne.s32.totalorder %s26, %s29
      %p38 = scmp.eq.s32.totalorder %s21, 1
      %p39 = por %p37, %p38
      %p40 = scmp.ne.s32.totalorder %s29, %s30
      %p41 = scmp.eq.s32.totalorder %s21, 0
      %p42 = por %p40, %p41
      %p43 = scmp.ne.s32.totalorder %s29, %s30
      %p44 = scmp.eq.s32.totalorder %s22, 1
      %p45 = por %p43, %p44
      %p47 = scmp.ne.s32.totalorder %s30, %s46
      %p48 = scmp.eq.s32.totalorder %s22, 0
      %p49 = por %p47, %p48
      %s51 = sadd.s32 %s50, 1
      %p54 = scmp.eq.s32.totalorder %s16, 1
      %p55 = scmp.ne.s32.totalorder %s50, %s52
      %p56 = scmp.eq.s32.totalorder %s16, 0
      %p57 = por %p55, %p56
      %p58 = scmp.ne.s32.totalorder %s50, %s52
      %p59 = scmp.eq.s32.totalorder %s21, 1
      %p60 = por %p58, %p59
      %p61 = scmp.ne.s32.totalorder %s52, %s53
      %p62 = scmp.eq.s32.totalorder %s21, 0
      %p63 = por %p61, %p62
      %p64 = scmp.ne.s32.totalorder %s52, %s53
      %p65 = scmp.eq.s32.totalorder %s22, 1
      %p66 = por %p64, %p65
      %p68 = scmp.ne.s32.totalorder %s53, %s67
      %p69 = scmp.eq.s32.totalorder %s22, 0
      %p70 = por %p68, %p69
      %s72 = sadd.s32 %s71, 1
      %p75 = scmp.eq.s32.totalorder %s16, 1
      %p76 = scmp.ne.s32.totalorder %s71, %s73
      %p77 = scmp.eq.s32.totalorder %s16, 0
      %p78 = por %p76, %p77
      %p79 = scmp.ne.s32.totalorder %s71, %s73
      %p80 = scmp.eq.s32.totalorder %s21, 1
      %p81 = por %p79, %p80
      %p82 = scmp.ne.s32.totalorder %s73, %s74
      %p83 = scmp.eq.s32.totalorder %s21, 0
      %p84 = por %p82, %p83
      %p85 = scmp.ne.s32.totalorder %s73, %s74
      %p86 = scmp.eq.s32.totalorder %s22, 1
      %p87 = por %p85, %p86
      %p89 = scmp.ne.s32.totalorder %s74, %s88
      %p90 = scmp.eq.s32.totalorder %s22, 0
      %p91 = por %p89, %p90
      %s93 = sadd.s32 %s92, 1
      %p96 = scmp.eq.s32.totalorder %s16, 1
      %p97 = scmp.ne.s32.totalorder %s92, %s94
      %p98 = scmp.eq.s32.totalorder %s16, 0
      %p99 = por %p97, %p98
      %p100 = scmp.ne.s32.totalorder %s92, %s94
      %p101 = scmp.eq.s32.totalorder %s21, 1
      %p102 = por %p100, %p101
      %p103 = scmp.ne.s32.totalorder %s94, %s95
      %p104 = scmp.eq.s32.totalorder %s21, 0
      %p105 = por %p103, %p104
      %p106 = scmp.ne.s32.totalorder %s94, %s95
      %p107 = scmp.eq.s32.totalorder %s22, 1
      %p108 = por %p106, %p107
      %p110 = scmp.ne.s32.totalorder %s95, %s109
      %p111 = scmp.eq.s32.totalorder %s22, 0
      %p112 = por %p110, %p111
      %s114 = sadd.s32 %s113, 1
      %p117 = scmp.eq.s32.totalorder %s16, 1
      %p118 = scmp.ne.s32.totalorder %s113, %s115
      %p119 = scmp.eq.s32.totalorder %s16, 0
      %p120 = por %p118, %p119
      %p121 = scmp.ne.s32.totalorder %s113, %s115
      %p122 = scmp.eq.s32.totalorder %s21, 1
      %p123 = por %p121, %p122
      %p124 = scmp.ne.s32.totalorder %s115, %s116
      %p125 = scmp.eq.s32.totalorder %s21, 0
      %p126 = por %p124, %p125
      %p127 = scmp.ne.s32.totalorder %s115, %s116
      %p128 = scmp.eq.s32.totalorder %s22, 1
      %p129 = por %p127, %p128
      %p131 = scmp.ne.s32.totalorder %s116, %s130
      %p132 = scmp.eq.s32.totalorder %s22, 0
      %p133 = por %p131, %p132
      %s135 = sadd.s32 %s134, 1
      %p138 = scmp.eq.s32.totalorder %s16, 1
      %p139 = scmp.ne.s32.totalorder %s134, %s136
      %p140 = scmp.eq.s32.totalorder %s16, 0
      %p141 = por %p139, %p140
      %p142 = scmp.ne.s32.totalorder %s134, %s136
      %p143 = scmp.eq.s32.totalorder %s21, 1
      %p144 = por %p142, %p143
      %p145 = scmp.ne.s32.totalorder %s136, %s137
      %p146 = scmp.eq.s32.totalorder %s21, 0
      %p147 = por %p145, %p146
      %p148 = scmp.ne.s32.totalorder %s136, %s137
      %p149 = scmp.eq.s32.totalorder %s22, 1
      %p150 = por %p148, %p149
      %p152 = scmp.ne.s32.totalorder %s137, %s151
      %p153 = scmp.eq.s32.totalorder %s22, 0
      %p154 = por %p152, %p153
      %s156 = sadd.s32 %s155, 1
      %p159 = scmp.eq.s32.totalorder %s16, 1
      %p160 = scmp.ne.s32.totalorder %s155, %s157
      %p161 = scmp.eq.s32.totalorder %s16, 0
      %p162 = por %p160, %p161
      %p163 = scmp.ne.s32.totalorder %s155, %s157
      %p164 = scmp.eq.s32.totalorder %s21, 1
      %p165 = por %p163, %p164
      %p166 = scmp.ne.s32.totalorder %s157, %s158
      %p167 = scmp.eq.s32.totalorder %s21, 0
      %p168 = por %p166, %p167
      %p169 = scmp.ne.s32.totalorder %s157, %s158
      %p170 = scmp.eq.s32.totalorder %s22, 1
      %p171 = por %p169, %p170
      %p173 = scmp.ne.s32.totalorder %s158, %s172
      %p174 = scmp.eq.s32.totalorder %s22, 0
      %p175 = por %p173, %p174
      %s176 = ssub.s32 %s16, %s23
      %p177 = scmp.eq.s32.totalorder %s176, 0
      %s179 = sadd.s32 %s178, 1
      %s180 = scalar_select %p177, %s178, %s179
      %p183 = pneg %p177
      %p184 = scmp.eq.s32.totalorder %s16, 1
      %p185 = por %p183, %p184
      %p186 = scmp.ne.s32.totalorder %s178, %s181
      %p187 = scmp.eq.s32.totalorder %s16, 0
      %p188 = por %p186, %p187
      %p189 = scmp.ne.s32.totalorder %s178, %s181
      %p190 = scmp.eq.s32.totalorder %s21, 1
      %p191 = por %p189, %p190
      %p192 = scmp.ne.s32.totalorder %s181, %s182
      %p193 = scmp.eq.s32.totalorder %s21, 0
      %p194 = por %p192, %p193
      %p195 = scmp.ne.s32.totalorder %s181, %s182
      %p196 = scmp.eq.s32.totalorder %s22, 1
      %p197 = por %p195, %p196
      %p199 = scmp.ne.s32.totalorder %s182, %s198
      %p200 = scmp.eq.s32.totalorder %s22, 0
      %p201 = por %p199, %p200
      %p202 = scmp.le.s32.totalorder 1, %s16
      %p203 = scmp.lt.s32.totalorder %s16, 3
      %p204 = pnand %p202, %p203
      %p205 = pneg %p204
      // Predicated region
      $region9: #{tpu_custom_call.1} parent=5 // pred_check
        _
      $region10: #{tpu_custom_call.1} parent=5 // pred_check_branch
        %207 = sbr.rel (%p204) target = $region12
      $region11: #{tpu_custom_call.1} parent=5 // pred_region
        %s208 = ssub.s32 %s16, 1
        // Predicated region
        $region13: #{tpu_custom_call.1} parent=11 // pred_check
          %p209 = pneg %p63
        $region14: #{tpu_custom_call.1} parent=11 // pred_check_branch
          %211 = sbr.rel (%p209) target = $region16
        $region15: #{tpu_custom_call.1} parent=11 // pred_region
          _
        $region16: #{tpu_custom_call.1} parent=11 // pred_fallthru
          _
        // Predicated region
        $region17: #{tpu_custom_call.1} parent=11 // pred_check
          %p212 = pneg %p84
        $region18: #{tpu_custom_call.1} parent=11 // pred_check_branch
          %214 = sbr.rel (%p212) target = $region20
        $region19: #{tpu_custom_call.1} parent=11 // pred_region
          _
        $region20: #{tpu_custom_call.1} parent=11 // pred_fallthru
          _
        // Predicated region
        $region21: #{tpu_custom_call.1} parent=11 // pred_check
          %p215 = pneg %p105
        $region22: #{tpu_custom_call.1} parent=11 // pred_check_branch
          %217 = sbr.rel (%p215) target = $region24
        $region23: #{tpu_custom_call.1} parent=11 // pred_region
          _
        $region24: #{tpu_custom_call.1} parent=11 // pred_fallthru
          _
        // Predicated region
        $region25: #{tpu_custom_call.1} parent=11 // pred_check
          %p218 = pneg %p126
        $region26: #{tpu_custom_call.1} parent=11 // pred_check_branch
          %220 = sbr.rel (%p218) target = $region28
        $region27: #{tpu_custom_call.1} parent=11 // pred_region
          _
        $region28: #{tpu_custom_call.1} parent=11 // pred_fallthru
          _
        // Predicated region
        $region29: #{tpu_custom_call.1} parent=11 // pred_check
          %p221 = pneg %p147
        $region30: #{tpu_custom_call.1} parent=11 // pred_check_branch
          %223 = sbr.rel (%p221) target = $region32
        $region31: #{tpu_custom_call.1} parent=11 // pred_region
          _
        $region32: #{tpu_custom_call.1} parent=11 // pred_fallthru
          _
        // Predicated region
        $region33: #{tpu_custom_call.1} parent=11 // pred_check
          %p224 = pneg %p168
        $region34: #{tpu_custom_call.1} parent=11 // pred_check_branch
          %226 = sbr.rel (%p224) target = $region36
        $region35: #{tpu_custom_call.1} parent=11 // pred_region
          _
        $region36: #{tpu_custom_call.1} parent=11 // pred_fallthru
          _
      $region12: #{tpu_custom_call.1} parent=5 // pred_fallthru
        _
      %p227 = scmp.lt.s32.totalorder %s16, 2
      // Predicated region
      $region37: #{tpu_custom_call.1} parent=5 // pred_check
        %p228 = pneg %p227
      $region38: #{tpu_custom_call.1} parent=5 // pred_check_branch
        %230 = sbr.rel (%p228) target = $region40
      $region39: #{tpu_custom_call.1} parent=5 // pred_region
        // Predicated region
        $region41: #{tpu_custom_call.1} parent=39 // pred_check
          %p231 = pneg %p36
        $region42: #{tpu_custom_call.1} parent=39 // pred_check_branch
          %233 = sbr.rel (%p231) target = $region44
        $region43: #{tpu_custom_call.1} parent=39 // pred_region
          %s234 = smul.u32 16, %s16
          %p235 = scmp.lt.s32.totalorder %s234, 31
          %s236 = scalar_select %p235, %s234, 31
          %s237 = smul.addr %s236, 8
          %s238 = scalar_lea.vmem %s0, %s237
          %s239 = smul.u32 16, %s16
        $region44: #{tpu_custom_call.1} parent=39 // pred_fallthru
          _
      $region40: #{tpu_custom_call.1} parent=5 // pred_fallthru
        _
      %p240 = scmp.le.s32.totalorder 1, %s16
      %p241 = scmp.lt.s32.totalorder %s16, 3
      %p242 = pnand %p240, %p241
      %p243 = pneg %p242
      // Predicated region
      $region45: #{tpu_custom_call.1} parent=5 // pred_check
        _
      $region46: #{tpu_custom_call.1} parent=5 // pred_check_branch
        %245 = sbr.rel (%p242) target = $region48
      $region47: #{tpu_custom_call.1} parent=5 // pred_region
        %s246 = ssub.s32 %s16, 1
        %s247 = smul.u32 16, %s21
        %p248 = scmp.lt.s32.totalorder %s247, 31
        %s249 = scalar_select %p248, %s247, 31
        %s250 = smul.addr %s249, 8
        %s251 = scalar_lea.vmem %s0, %s250
        %p252 = pneg %p42
        %p253 = pneg %p39
        %p254 = pneg %p63
        %p255 = pneg %p60
        %p256 = pneg %p84
        %p257 = pneg %p81
        %p258 = pneg %p105
        %p259 = pneg %p102
        %p260 = pneg %p126
        %p261 = pneg %p123
        %p262 = pneg %p147
        %p263 = pneg %p144
        %p264 = pneg %p168
        %p265 = pneg %p165
        %p266 = pneg %p194
        %p267 = pneg %p191
        %s268 = sand.u32 %s181, 1
        %s269 = scalar_lea.sflag [#allocation3], %s268
        %s270 = sand.u32 %s181, 1
        %s271 = smul.addr %s270, 4
        %s272 = scalar_lea.vmem [#allocation2], %s271
        %s273 = smul.u32 16, %s21
        %p274 = scmp.lt.s32.totalorder %s273, 31
        %s275 = scalar_select %p274, %s273, 31
        %s276 = smul.addr %s275, 8
        %s277 = scalar_lea.vmem %s0, %s276
        %s278 = smul.u32 16, %s21
        %v279 = vld [vmem:[%s277] sm:$0xff]
        %v280 = vld [vmem:[%s277 + $0x8] sm:$0xff]
        %v281 = vld [vmem:[%s277 + $0x10] sm:$0xff]
        %v282 = vld [vmem:[%s277 + $0x18] sm:$0xff]
        %v283 = vld [vmem:[%s277 + $0x20] sm:$0xff]
        %v284 = vld [vmem:[%s277 + $0x28] sm:$0xff]
        %v285 = vld [vmem:[%s277 + $0x30] sm:$0xff]
        %v286 = vld [vmem:[%s277 + $0x38] sm:$0xff]
        %v287 = vld [vmem:[%s277 + $0x40] sm:$0xff]
        %v288 = vld [vmem:[%s277 + $0x48] sm:$0xff]
        %v289 = vld [vmem:[%s277 + $0x50] sm:$0xff]
        %v290 = vld [vmem:[%s277 + $0x58] sm:$0xff]
        %v291 = vld [vmem:[%s277 + $0x60] sm:$0xff]
        %v292 = vld [vmem:[%s277 + $0x68] sm:$0xff]
        %v293 = vld [vmem:[%s277 + $0x70] sm:$0xff]
        %v294 = vld [vmem:[%s277 + $0x78] sm:$0xff]
        %v295 = vld [vmem:[%s1] sm:$0xff]
        %v296 = vld [vmem:[%s1 + $0x8] sm:$0xff]
        %v297 = vld [vmem:[%s1 + $0x10] sm:$0xff]
        %v298 = vld [vmem:[%s1 + $0x18] sm:$0xff]
        %v299 = vld [vmem:[%s1 + $0x20] sm:$0xff]
        %v300 = vld [vmem:[%s1 + $0x28] sm:$0xff]
        %v301 = vld [vmem:[%s1 + $0x30] sm:$0xff]
        %v302 = vld [vmem:[%s1 + $0x38] sm:$0xff]
        %v303 = vld [vmem:[%s2] sm:$0xff]
        %v304 = vld [vmem:[%s2 + $0x8] sm:$0xff]
        %v305 = vld [vmem:[%s2 + $0x10] sm:$0xff]
        %v306 = vld [vmem:[%s2 + $0x18] sm:$0xff]
        %v307 = vld [vmem:[%s2 + $0x20] sm:$0xff]
        %v308 = vld [vmem:[%s2 + $0x28] sm:$0xff]
        %v309 = vld [vmem:[%s2 + $0x30] sm:$0xff]
        %v310 = vld [vmem:[%s2 + $0x38] sm:$0xff]
        %312 = vset.pattern.permute.xlu0 0
        %313 = vperm.xlu0 %312, %v303
        %v314 = vpop.permute.xlu0 %313
        %317 = vset.pattern.permute.xlu0 0
        %318 = vperm.xlu0 %317, %v304
        %v319 = vpop.permute.xlu0 %318
        %322 = vset.pattern.permute.xlu0 0
        %323 = vperm.xlu0 %322, %v305
        %v324 = vpop.permute.xlu0 %323
        %327 = vset.pattern.permute.xlu0 0
        %328 = vperm.xlu0 %327, %v306
        %v329 = vpop.permute.xlu0 %328
        %332 = vset.pattern.permute.xlu0 0
        %333 = vperm.xlu0 %332, %v307
        %v334 = vpop.permute.xlu0 %333
        %337 = vset.pattern.permute.xlu0 0
        %338 = vperm.xlu0 %337, %v308
        %v339 = vpop.permute.xlu0 %338
        %342 = vset.pattern.permute.xlu0 0
        %343 = vperm.xlu0 %342, %v309
        %v344 = vpop.permute.xlu0 %343
        %347 = vset.pattern.permute.xlu0 0
        %348 = vperm.xlu0 %347, %v310
        %v349 = vpop.permute.xlu0 %348
        %vm351 = vcmask 261120
        %v353 = vsel %vm351, %v295, 0
        %v356 = vsel %vm351, %v296, 0
        %v359 = vsel %vm351, %v297, 0
        %v362 = vsel %vm351, %v298, 0
        %v365 = vsel %vm351, %v299, 0
        %v368 = vsel %vm351, %v300, 0
        %v371 = vsel %vm351, %v301, 0
        %v374 = vsel %vm351, %v302, 0
        %v377 = vsel %vm351, %v279, 0
        %v380 = vsel %vm351, %v280, 0
        %v383 = vsel %vm351, %v281, 0
        %v386 = vsel %vm351, %v282, 0
        %v389 = vsel %vm351, %v283, 0
        %v392 = vsel %vm351, %v284, 0
        %v395 = vsel %vm351, %v285, 0
        %v398 = vsel %vm351, %v286, 0
        %v401 = vsel %vm351, %v287, 0
        %v404 = vsel %vm351, %v288, 0
        %v407 = vsel %vm351, %v289, 0
        %v410 = vsel %vm351, %v290, 0
        %v413 = vsel %vm351, %v291, 0
        %v416 = vsel %vm351, %v292, 0
        %v419 = vsel %vm351, %v293, 0
        %v422 = vsel %vm351, %v294, 0
        %424 = vmatprep.subr.mxu0 0.0
        %425 = vmatpush1.xpose.msra.mxu0 %v422
        %426 = vmatprep.subr.mxu0 0.0
        %427 = vmatpush1.xpose.msra.mxu0 %v419
        %428 = vmatprep.subr.mxu0 0.0
        %429 = vmatpush1.xpose.msra.mxu0 %v416
        %430 = vmatprep.subr.mxu0 0.0
        %431 = vmatpush1.xpose.msra.mxu0 %v413
        %432 = vmatprep.subr.mxu0 0.0
        %433 = vmatpush1.xpose.msra.mxu0 %v410
        %434 = vmatprep.subr.mxu0 0.0
        %435 = vmatpush1.xpose.msra.mxu0 %v407
        %436 = vmatprep.subr.mxu0 0.0
        %437 = vmatpush1.xpose.msra.mxu0 %v404
        %438 = vmatprep.subr.mxu0 0.0
        %439 = vmatpush1.xpose.msra.mxu0 %v401
        %440 = vmatprep.subr.mxu0 0.0
        %441 = vmatpush1.xpose.msra.mxu0 %v398
        %442 = vmatprep.subr.mxu0 0.0
        %443 = vmatpush1.xpose.msra.mxu0 %v395
        %444 = vmatprep.subr.mxu0 0.0
        %445 = vmatpush1.xpose.msra.mxu0 %v392
        %446 = vmatprep.subr.mxu0 0.0
        %447 = vmatpush1.xpose.msra.mxu0 %v389
        %448 = vmatprep.subr.mxu0 0.0
        %449 = vmatpush1.xpose.msra.mxu0 %v386
        %450 = vmatprep.subr.mxu0 0.0
        %451 = vmatpush1.xpose.msra.mxu0 %v383
        %452 = vmatprep.subr.mxu0 0.0
        %453 = vmatpush1.xpose.msra.mxu0 %v380
        %454 = vmatprep.subr.mxu0 0.0
        %455 = vmatpush1.xpose.msra.mxu0 %v377
        %456 = vmatprep.subr.mxu0 0.0
        %457 = vmatpush2.xpose.msra.mxu0 0.0
        %458 = vmatprep.subr.mxu0 0.0
        %459 = vmatpush2.xpose.msra.mxu0 0.0
        %460 = vmatprep.subr.mxu0 0.0
        %461 = vmatpush2.xpose.msra.mxu0 0.0
        %462 = vmatprep.subr.mxu0 0.0
        %463 = vmatpush2.xpose.msra.mxu0 0.0
        %464 = vmatprep.subr.mxu0 0.0
        %465 = vmatpush2.xpose.msra.mxu0 0.0
        %466 = vmatprep.subr.mxu0 0.0
        %467 = vmatpush2.xpose.msra.mxu0 0.0
        %468 = vmatprep.subr.mxu0 0.0
        %469 = vmatpush2.xpose.msra.mxu0 0.0
        %470 = vmatprep.subr.mxu0 0.0
        %471 = vmatpush2.xpose.msra.mxu0 0.0
        %472 = vmatprep.subr.mxu0 0.0
        %473 = vmatpush2.xpose.msra.mxu0 0.0
        %474 = vmatprep.subr.mxu0 0.0
        %475 = vmatpush2.xpose.msra.mxu0 0.0
        %476 = vmatprep.subr.mxu0 0.0
        %477 = vmatpush2.xpose.msra.mxu0 0.0
        %478 = vmatprep.subr.mxu0 0.0
        %479 = vmatpush2.xpose.msra.mxu0 0.0
        %480 = vmatprep.subr.mxu0 0.0
        %481 = vmatpush2.xpose.msra.mxu0 0.0
        %482 = vmatprep.subr.mxu0 0.0
        %483 = vmatpush2.xpose.msra.mxu0 0.0
        %484 = vmatprep.subr.mxu0 0.0
        %485 = vmatpush2.xpose.msra.mxu0 0.0
        %486 = vmatprep.subr.mxu0 0.0
        %487 = vmatpush2.xpose.msra.mxu0 0.0
        %488 = vmatprep.mubr.f32.mxu0 0.0
        %489 = vmatmul.mubr.f32.gmra.mxu0 %v353
        %v490 = vpop.f32.mrf.mxu0
        %v491 = vadd.f32 %v314, %v490
        %v492 = vpop.f32.mrf.mxu0
        %493 = vmatprep.mubr.f32.mxu0 0.0
        %494 = vmatmul.mubr.f32.gmra.mxu0 %v356
        %v495 = vpop.f32.mrf.mxu0
        %v496 = vadd.f32 %v319, %v495
        %v497 = vpop.f32.mrf.mxu0
        %498 = vmatprep.mubr.f32.mxu0 0.0
        %499 = vmatmul.mubr.f32.gmra.mxu0 %v359
        %v500 = vpop.f32.mrf.mxu0
        %v501 = vadd.f32 %v324, %v500
        %v502 = vpop.f32.mrf.mxu0
        %503 = vmatprep.mubr.f32.mxu0 0.0
        %504 = vmatmul.mubr.f32.gmra.mxu0 %v362
        %v505 = vpop.f32.mrf.mxu0
        %v506 = vadd.f32 %v329, %v505
        %v507 = vpop.f32.mrf.mxu0
        %508 = vmatprep.mubr.f32.mxu0 0.0
        %509 = vmatmul.mubr.f32.gmra.mxu0 %v365
        %v510 = vpop.f32.mrf.mxu0
        %v511 = vadd.f32 %v334, %v510
        %v512 = vpop.f32.mrf.mxu0
        %513 = vmatprep.mubr.f32.mxu0 0.0
        %514 = vmatmul.mubr.f32.gmra.mxu0 %v368
        %v515 = vpop.f32.mrf.mxu0
        %v516 = vadd.f32 %v339, %v515
        %v517 = vpop.f32.mrf.mxu0
        %518 = vmatprep.mubr.f32.mxu0 0.0
        %519 = vmatmul.mubr.f32.gmra.mxu0 %v371
        %v520 = vpop.f32.mrf.mxu0
        %v521 = vadd.f32 %v344, %v520
        %v522 = vpop.f32.mrf.mxu0
        %523 = vmatprep.mubr.f32.mxu0 0.0
        %524 = vmatmul.mubr.f32.gmra.mxu0 %v374
        %v525 = vpop.f32.mrf.mxu0
        %v526 = vadd.f32 %v349, %v525
        %v527 = vpop.f32.mrf.mxu0
        %528 = vdwg.mxu0
        %v529 = vtanh.pop %v491
        %v530 = vtanh.pop %v496
        %v531 = vtanh.pop %v501
        %v532 = vtanh.pop %v506
        %v533 = vtanh.pop %v511
        %v534 = vtanh.pop %v516
        %v535 = vtanh.pop %v521
        %v536 = vtanh.pop %v526
        %v537 = vld [vmem:[%s3] sm:$0xff]
        %v538 = vld [vmem:[%s3 + $0x8] sm:$0xff]
        %v539 = vld [vmem:[%s3 + $0x10] sm:$0xff]
        %v540 = vld [vmem:[%s3 + $0x18] sm:$0xff]
        %v541 = vld [vmem:[%s3 + $0x20] sm:$0xff]
        %v542 = vld [vmem:[%s3 + $0x28] sm:$0xff]
        %v543 = vld [vmem:[%s3 + $0x30] sm:$0xff]
        %v544 = vld [vmem:[%s3 + $0x38] sm:$0xff]
        %v545 = vld [vmem:[%s4] sm:$0xff]
        %v546 = vld [vmem:[%s4 + $0x8] sm:$0xff]
        %v547 = vld [vmem:[%s4 + $0x10] sm:$0xff]
        %v548 = vld [vmem:[%s4 + $0x18] sm:$0xff]
        %v549 = vld [vmem:[%s4 + $0x20] sm:$0xff]
        %v550 = vld [vmem:[%s4 + $0x28] sm:$0xff]
        %v551 = vld [vmem:[%s4 + $0x30] sm:$0xff]
        %v552 = vld [vmem:[%s4 + $0x38] sm:$0xff]
        %554 = vset.pattern.permute.xlu0 0
        %555 = vperm.xlu0 %554, %v545
        %v556 = vpop.permute.xlu0 %555
        %559 = vset.pattern.permute.xlu0 0
        %560 = vperm.xlu0 %559, %v546
        %v561 = vpop.permute.xlu0 %560
        %564 = vset.pattern.permute.xlu0 0
        %565 = vperm.xlu0 %564, %v547
        %v566 = vpop.permute.xlu0 %565
        %569 = vset.pattern.permute.xlu0 0
        %570 = vperm.xlu0 %569, %v548
        %v571 = vpop.permute.xlu0 %570
        %574 = vset.pattern.permute.xlu0 0
        %575 = vperm.xlu0 %574, %v549
        %v576 = vpop.permute.xlu0 %575
        %579 = vset.pattern.permute.xlu0 0
        %580 = vperm.xlu0 %579, %v550
        %v581 = vpop.permute.xlu0 %580
        %584 = vset.pattern.permute.xlu0 0
        %585 = vperm.xlu0 %584, %v551
        %v586 = vpop.permute.xlu0 %585
        %589 = vset.pattern.permute.xlu0 0
        %590 = vperm.xlu0 %589, %v552
        %v591 = vpop.permute.xlu0 %590
        %vm593 = vcmask 523264
        %v595 = vsel %vm593, %v537, 0
        %v598 = vsel %vm593, %v538, 0
        %v601 = vsel %vm593, %v539, 0
        %v604 = vsel %vm593, %v540, 0
        %v607 = vsel %vm593, %v541, 0
        %v610 = vsel %vm593, %v542, 0
        %v613 = vsel %vm593, %v543, 0
        %v616 = vsel %vm593, %v544, 0
        %618 = vmatprep.subr.mxu0 0.0
        %619 = vmatpush1.msra.mxu0 0.0
        %620 = vmatprep.subr.mxu0 0.0
        %621 = vmatpush1.msra.mxu0 0.0
        %622 = vmatprep.subr.mxu0 0.0
        %623 = vmatpush1.msra.mxu0 0.0
        %624 = vmatprep.subr.mxu0 0.0
        %625 = vmatpush1.msra.mxu0 0.0
        %626 = vmatprep.subr.mxu0 0.0
        %627 = vmatpush1.msra.mxu0 0.0
        %628 = vmatprep.subr.mxu0 0.0
        %629 = vmatpush1.msra.mxu0 0.0
        %630 = vmatprep.subr.mxu0 0.0
        %631 = vmatpush1.msra.mxu0 0.0
        %632 = vmatprep.subr.mxu0 0.0
        %633 = vmatpush1.msra.mxu0 0.0
        %634 = vmatprep.subr.mxu0 0.0
        %635 = vmatpush1.msra.mxu0 %v536
        %636 = vmatprep.subr.mxu0 0.0
        %637 = vmatpush1.msra.mxu0 %v535
        %638 = vmatprep.subr.mxu0 0.0
        %639 = vmatpush1.msra.mxu0 %v534
        %640 = vmatprep.subr.mxu0 0.0
        %641 = vmatpush1.msra.mxu0 %v533
        %642 = vmatprep.subr.mxu0 0.0
        %643 = vmatpush1.msra.mxu0 %v532
        %644 = vmatprep.subr.mxu0 0.0
        %645 = vmatpush1.msra.mxu0 %v531
        %646 = vmatprep.subr.mxu0 0.0
        %647 = vmatpush1.msra.mxu0 %v530
        %648 = vmatprep.subr.mxu0 0.0
        %649 = vmatpush1.msra.mxu0 %v529
        %650 = vmatprep.subr.mxu0 0.0
        %651 = vmatpush2.msra.mxu0 0.0
        %652 = vmatprep.subr.mxu0 0.0
        %653 = vmatpush2.msra.mxu0 0.0
        %654 = vmatprep.subr.mxu0 0.0
        %655 = vmatpush2.msra.mxu0 0.0
        %656 = vmatprep.subr.mxu0 0.0
        %657 = vmatpush2.msra.mxu0 0.0
        %658 = vmatprep.subr.mxu0 0.0
        %659 = vmatpush2.msra.mxu0 0.0
        %660 = vmatprep.subr.mxu0 0.0
        %661 = vmatpush2.msra.mxu0 0.0
        %662 = vmatprep.subr.mxu0 0.0
        %663 = vmatpush2.msra.mxu0 0.0
        %664 = vmatprep.subr.mxu0 0.0
        %665 = vmatpush2.msra.mxu0 0.0
        %666 = vmatprep.subr.mxu0 0.0
        %667 = vmatpush2.msra.mxu0 0.0
        %668 = vmatprep.subr.mxu0 0.0
        %669 = vmatpush2.msra.mxu0 0.0
        %670 = vmatprep.subr.mxu0 0.0
        %671 = vmatpush2.msra.mxu0 0.0
        %672 = vmatprep.subr.mxu0 0.0
        %673 = vmatpush2.msra.mxu0 0.0
        %674 = vmatprep.subr.mxu0 0.0
        %675 = vmatpush2.msra.mxu0 0.0
        %676 = vmatprep.subr.mxu0 0.0
        %677 = vmatpush2.msra.mxu0 0.0
        %678 = vmatprep.subr.mxu0 0.0
        %679 = vmatpush2.msra.mxu0 0.0
        %680 = vmatprep.subr.mxu0 0.0
        %681 = vmatpush2.msra.mxu0 0.0
        %682 = vmatprep.mubr.f32.mxu0 0.0
        %683 = vmatmul.mubr.f32.gmra.mxu0 %v595
        %v684 = vpop.f32.mrf.mxu0
        %v685 = vadd.f32 %v556, %v684
        %v686 = vpop.f32.mrf.mxu0
        %687 = vmatprep.mubr.f32.mxu0 0.0
        %688 = vmatmul.mubr.f32.gmra.mxu0 %v598
        %v689 = vpop.f32.mrf.mxu0
        %v690 = vadd.f32 %v561, %v689
        %v691 = vpop.f32.mrf.mxu0
        %692 = vmatprep.mubr.f32.mxu0 0.0
        %693 = vmatmul.mubr.f32.gmra.mxu0 %v601
        %v694 = vpop.f32.mrf.mxu0
        %v695 = vadd.f32 %v566, %v694
        %v696 = vpop.f32.mrf.mxu0
        %697 = vmatprep.mubr.f32.mxu0 0.0
        %698 = vmatmul.mubr.f32.gmra.mxu0 %v604
        %v699 = vpop.f32.mrf.mxu0
        %v700 = vadd.f32 %v571, %v699
        %v701 = vpop.f32.mrf.mxu0
        %702 = vmatprep.mubr.f32.mxu0 0.0
        %703 = vmatmul.mubr.f32.gmra.mxu0 %v607
        %v704 = vpop.f32.mrf.mxu0
        %v705 = vadd.f32 %v576, %v704
        %v706 = vpop.f32.mrf.mxu0
        %707 = vmatprep.mubr.f32.mxu0 0.0
        %708 = vmatmul.mubr.f32.gmra.mxu0 %v610
        %v709 = vpop.f32.mrf.mxu0
        %v710 = vadd.f32 %v581, %v709
        %v711 = vpop.f32.mrf.mxu0
        %712 = vmatprep.mubr.f32.mxu0 0.0
        %713 = vmatmul.mubr.f32.gmra.mxu0 %v613
        %v714 = vpop.f32.mrf.mxu0
        %v715 = vadd.f32 %v586, %v714
        %v716 = vpop.f32.mrf.mxu0
        %717 = vmatprep.mubr.f32.mxu0 0.0
        %718 = vmatmul.mubr.f32.gmra.mxu0 %v616
        %v719 = vpop.f32.mrf.mxu0
        %v720 = vadd.f32 %v591, %v719
        %v721 = vpop.f32.mrf.mxu0
        %722 = vdwg.mxu0
        %v723 = vtanh.pop %v685
        %v724 = vtanh.pop %v690
        %v725 = vtanh.pop %v695
        %v726 = vtanh.pop %v700
        %v727 = vtanh.pop %v705
        %v728 = vtanh.pop %v710
        %v729 = vtanh.pop %v715
        %v730 = vtanh.pop %v720
        %v731 = vld [vmem:[%s5] sm:$0xf]
        %v732 = vld [vmem:[%s6] sm:$0xf]
        %734 = vset.pattern.permute.xlu0 0
        %735 = vperm.xlu0 %734, %v732
        %v736 = vpop.permute.xlu0 %735
        %v739 = vsel %vm593, %v731, 0
        %741 = vmatprep.subr.mxu0 0.0
        %742 = vmatpush1.msra.mxu0 0.0
        %743 = vmatprep.subr.mxu0 0.0
        %744 = vmatpush1.msra.mxu0 0.0
        %745 = vmatprep.subr.mxu0 0.0
        %746 = vmatpush1.msra.mxu0 0.0
        %747 = vmatprep.subr.mxu0 0.0
        %748 = vmatpush1.msra.mxu0 0.0
        %749 = vmatprep.subr.mxu0 0.0
        %750 = vmatpush1.msra.mxu0 0.0
        %751 = vmatprep.subr.mxu0 0.0
        %752 = vmatpush1.msra.mxu0 0.0
        %753 = vmatprep.subr.mxu0 0.0
        %754 = vmatpush1.msra.mxu0 0.0
        %755 = vmatprep.subr.mxu0 0.0
        %756 = vmatpush1.msra.mxu0 0.0
        %757 = vmatprep.subr.mxu0 0.0
        %758 = vmatpush1.msra.mxu0 %v730
        %759 = vmatprep.subr.mxu0 0.0
        %760 = vmatpush1.msra.mxu0 %v729
        %761 = vmatprep.subr.mxu0 0.0
        %762 = vmatpush1.msra.mxu0 %v728
        %763 = vmatprep.subr.mxu0 0.0
        %764 = vmatpush1.msra.mxu0 %v727
        %765 = vmatprep.subr.mxu0 0.0
        %766 = vmatpush1.msra.mxu0 %v726
        %767 = vmatprep.subr.mxu0 0.0
        %768 = vmatpush1.msra.mxu0 %v725
        %769 = vmatprep.subr.mxu0 0.0
        %770 = vmatpush1.msra.mxu0 %v724
        %771 = vmatprep.subr.mxu0 0.0
        %772 = vmatpush1.msra.mxu0 %v723
        %773 = vmatprep.subr.mxu0 0.0
        %774 = vmatpush2.msra.mxu0 0.0
        %775 = vmatprep.subr.mxu0 0.0
        %776 = vmatpush2.msra.mxu0 0.0
        %777 = vmatprep.subr.mxu0 0.0
        %778 = vmatpush2.msra.mxu0 0.0
        %779 = vmatprep.subr.mxu0 0.0
        %780 = vmatpush2.msra.mxu0 0.0
        %781 = vmatprep.subr.mxu0 0.0
        %782 = vmatpush2.msra.mxu0 0.0
        %783 = vmatprep.subr.mxu0 0.0
        %784 = vmatpush2.msra.mxu0 0.0
        %785 = vmatprep.subr.mxu0 0.0
        %786 = vmatpush2.msra.mxu0 0.0
        %787 = vmatprep.subr.mxu0 0.0
        %788 = vmatpush2.msra.mxu0 0.0
        %789 = vmatprep.subr.mxu0 0.0
        %790 = vmatpush2.msra.mxu0 0.0
        %791 = vmatprep.subr.mxu0 0.0
        %792 = vmatpush2.msra.mxu0 0.0
        %793 = vmatprep.subr.mxu0 0.0
        %794 = vmatpush2.msra.mxu0 0.0
        %795 = vmatprep.subr.mxu0 0.0
        %796 = vmatpush2.msra.mxu0 0.0
        %797 = vmatprep.subr.mxu0 0.0
        %798 = vmatpush2.msra.mxu0 0.0
        %799 = vmatprep.subr.mxu0 0.0
        %800 = vmatpush2.msra.mxu0 0.0
        %801 = vmatprep.subr.mxu0 0.0
        %802 = vmatpush2.msra.mxu0 0.0
        %803 = vmatprep.subr.mxu0 0.0
        %804 = vmatpush2.msra.mxu0 0.0
        %805 = vmatprep.mubr.f32.mxu0 0.0
        %806 = vmatmul.mubr.f32.gmra.mxu0 %v739
        %v807 = vpop.f32.mrf.mxu0
        %v808 = vadd.f32 %v736, %v807
        %v809 = vpop.f32.mrf.mxu0
        %810 = vdwg.mxu0
        %v811 = vxor.u32 %v808, 2147483648
        %v812 = vmul.f32 %v811, 1.442695
        %v813 = vpow.pop %v812
        %v814 = vadd.f32 %v813, 1.0
        %v815 = vrcp.pop %v814
        %v816 = vmul.f32 1.0, %v815
        %817 = vst [vmem:[%s272] sm:$0xf] %v816
        %s818 = sand.u32 %s181, 1
        %s819 = scalar_lea.sflag [#allocation3], %s818
        %s820 = sand.u32 %s181, 1
        %s821 = smul.addr %s820, 4
        %s822 = scalar_lea.vmem [#allocation2], %s821
        // Predicated region
        $region49: #{tpu_custom_call.1} parent=47 // pred_check
          %p823 = pneg %p191
        $region50: #{tpu_custom_call.1} parent=47 // pred_check_branch
          %825 = sbr.rel (%p823) target = $region52
        $region51: #{tpu_custom_call.1} parent=47 // pred_region
          %s827 = ssub.s32 64, 64
          %828 = vsyncadd %s819, %s827
          %s829 = smul.addr %s21, 64
          %s830 = scalar_lea.hbm %s7, %s829
          %s832 = sshll.u32 %s822, 4
          %s833 = int_to_ptr.vmem [resolvable:$true] %s832
          %835 = dma.vmem_to_hbm [thread:$0]  %s833, 64, %s830, %s819
        $region52: #{tpu_custom_call.1} parent=47 // pred_fallthru
          _
      $region48: #{tpu_custom_call.1} parent=5 // pred_fallthru
        _
      %p836 = scmp.le.s32.totalorder 2, %s16
      // Predicated region
      $region53: #{tpu_custom_call.1} parent=5 // pred_check
        %p837 = pneg %p836
      $region54: #{tpu_custom_call.1} parent=5 // pred_check_branch
        %839 = sbr.rel (%p837) target = $region56
      $region55: #{tpu_custom_call.1} parent=5 // pred_region
        %s840 = ssub.s32 %s16, 2
        // Predicated region
        $region57: #{tpu_custom_call.1} parent=55 // pred_check
          %p841 = pneg %p197
        $region58: #{tpu_custom_call.1} parent=55 // pred_check_branch
          %843 = sbr.rel (%p841) target = $region60
        $region59: #{tpu_custom_call.1} parent=55 // pred_region
          %s844 = sand.u32 %s182, 1
          %s845 = scalar_lea.sflag [#allocation3], %s844
          %s846 = sand.u32 %s182, 1
          %s847 = smul.addr %s846, 4
          %s848 = scalar_lea.vmem [#allocation2], %s847
          %849 = dma.done %s845, 64
        $region60: #{tpu_custom_call.1} parent=55 // pred_fallthru
          _
      $region56: #{tpu_custom_call.1} parent=5 // pred_fallthru
        _
    $region6: #{tpu_custom_call.1} parent=1 // loop_footer
      %s20 = sadd.s32 1, %s16
    $region7: #{tpu_custom_call.1} parent=1 // loop_footer_branch
      %15 = sbr.rel target = $region3
    $region8: #{tpu_custom_call.1} parent=1 // loop_exit
      _
    %850 = vsyncpa [#allocation3], 1
    %s851 = scalar_lea.sflag [#allocation3], 1
    %852 = vsyncpa %s851, 1

</llo_original>
